<compile_context>
chip_gen: v5e
topology: v5e:2x2
jax: 0.10.0
libtpu: 0.0.40
codegen_flags: <defaults>
</compile_context>

<pallas_src>
import math
import functools

import jax
import jax.numpy as jnp
from jax import lax
from jax.experimental import pallas as pl
from jax.experimental.pallas import tpu as pltpu
import numpy as np


_VMEM_LIMIT = 32 * 1024 * 1024  # explicit scoped-VMEM budget, safe on v5e/v6e/v7x


def _pick_tile(dim, preferred):
    """Largest preferred tile that evenly divides `dim`, else the full dim."""
    for t in preferred:
        if dim >= t and dim % t == 0:
            return t
    return dim


# ---------------------------------------------------------------------------
# Tiled linear:  out = x @ w + b        (bf16 MXU operands, f32 accumulation)
# ---------------------------------------------------------------------------
def _linear_kernel_fused(x_ref, w_ref, b_ref, o_ref):
    # Single K tile: no accumulator scratch round trip, write result directly.
    acc = jnp.dot(x_ref[...].astype(jnp.bfloat16),
                  w_ref[...].astype(jnp.bfloat16),
                  preferred_element_type=jnp.float32)
    o_ref[...] = (acc + b_ref[...].astype(jnp.float32)).astype(o_ref.dtype)


def _linear_kernel_acc(x_ref, w_ref, b_ref, o_ref, acc_ref):
    # General path: f32 VMEM accumulator resident across the K grid axis.
    @pl.when(pl.program_id(2) == 0)
    def _init():
        acc_ref[...] = jnp.zeros_like(acc_ref)

    acc_ref[...] += jnp.dot(x_ref[...].astype(jnp.bfloat16),
                            w_ref[...].astype(jnp.bfloat16),
                            preferred_element_type=jnp.float32)

    @pl.when(pl.program_id(2) == pl.num_programs(2) - 1)
    def _finalize():
        o_ref[...] = (acc_ref[...] + b_ref[...].astype(jnp.float32)
                      ).astype(o_ref.dtype)


def pallas_linear(x2d, w, b, *,
                  tm_pref=(512, 256, 128),
                  tn_pref=(512, 384, 256, 128),
                  tk_pref=(512, 256, 128)):
    """x2d: (M, K), w: (K, N), b: (N,) -> (M, N)."""
    M, K = x2d.shape
    N = w.shape[1]
    tm = _pick_tile(M, tm_pref)
    tn = _pick_tile(N, tn_pref)
    tk = _pick_tile(K, tk_pref)
    b2d = b.reshape(1, N)

    if K == tk:
        # K fits a single tile -> skip the accumulator scratch entirely.
        return pl.pallas_call(
            _linear_kernel_fused,
            out_shape=jax.ShapeDtypeStruct((M, N), x2d.dtype),
            grid=(M // tm, N // tn),
            in_specs=[
                pl.BlockSpec((tm, K), lambda i, j: (i, 0)),
                pl.BlockSpec((K, tn), lambda i, j: (0, j)),
                pl.BlockSpec((1, tn), lambda i, j: (0, j)),
            ],
            out_specs=pl.BlockSpec((tm, tn), lambda i, j: (i, j)),
            compiler_params=pltpu.CompilerParams(
                dimension_semantics=("parallel", "parallel"),
                vmem_limit_bytes=_VMEM_LIMIT),
        )(x2d, w, b2d)

    return pl.pallas_call(
        _linear_kernel_acc,
        out_shape=jax.ShapeDtypeStruct((M, N), x2d.dtype),
        grid=(M // tm, N // tn, K // tk),
        in_specs=[
            pl.BlockSpec((tm, tk), lambda i, j, k: (i, k)),
            pl.BlockSpec((tk, tn), lambda i, j, k: (k, j)),
            pl.BlockSpec((1, tn), lambda i, j, k: (0, j)),
        ],
        out_specs=pl.BlockSpec((tm, tn), lambda i, j, k: (i, j)),
        scratch_shapes=[pltpu.VMEM((tm, tn), jnp.float32)],
        compiler_params=pltpu.CompilerParams(
            dimension_semantics=("parallel", "parallel", "arbitrary"),
            vmem_limit_bytes=_VMEM_LIMIT),
    )(x2d, w, b2d)


# ---------------------------------------------------------------------------
# Flash-style causal attention, head-grouped, fed directly from packed qkv
# ---------------------------------------------------------------------------
def _flash_attn_kernel(q_ref, k_ref, v_ref, o_ref, m_sc, l_sc, acc_sc, *,
                       scale, tq, tk, heads_per_blk, hd):
    # q_ref: (1, tq, gw), k_ref/v_ref: (1, tk, gw), o_ref: (1, tq, gw)
    # m_sc/l_sc: (tq, heads_per_blk) f32, acc_sc: (tq, gw) f32
    # (gw = heads_per_blk * hd = 128-wide lane-dense head group)
    qi = pl.program_id(2)
    ki = pl.program_id(3)

    @pl.when(ki == 0)
    def _init():
        m_sc[...] = jnp.full_like(m_sc, -1e30)
        l_sc[...] = jnp.zeros_like(l_sc)
        acc_sc[...] = jnp.zeros_like(acc_sc)

    # Causal block skipping: only compute kv blocks touching the lower triangle
    # of this q block (kv block 0 is never skipped, so every row sees at least
    # one unmasked score before any fully-masked block -> no NaNs).
    @pl.when(ki * tk <= qi * tq + (tq - 1))
    def _compute():
        # Causal mask built once per kv block, shared by all heads in the group.
        # TODO(synk): add a lax.cond fast path that skips the mask entirely for
        # blocks fully below the diagonal (zero value at the whole-T tiles used
        # here, small win for long sequences with many interior blocks).
        row = qi * tq + lax.broadcasted_iota(jnp.int32, (tq, tk), 0)
        col = ki * tk + lax.broadcasted_iota(jnp.int32, (tq, tk), 1)
        causal = col <= row

        for h in range(heads_per_blk):          # static unroll over the group
            sl = slice(h * hd, (h + 1) * hd)
            # Fold 1/sqrt(hd) into q (tq*hd mults, not tq*tk); bf16 MXU operands.
            q = (q_ref[0, :, sl] * scale).astype(jnp.bfloat16)   # (tq, hd)
            k = k_ref[0, :, sl].astype(jnp.bfloat16)             # (tk, hd)
            v = v_ref[0, :, sl].astype(jnp.bfloat16)             # (tk, hd)

            # q @ k^T contracting the last dims; no materialized transpose.
            s = lax.dot_general(q, k, (((1,), (1,)), ((), ())),
                                preferred_element_type=jnp.float32)
            s = jnp.where(causal, s, -1e30)      # finite mask, robust to tiling

            m_prev = m_sc[:, h:h + 1]                              # (tq, 1)
            m_new = jnp.maximum(m_prev, jnp.max(s, axis=-1, keepdims=True))
            alpha = jnp.exp(m_prev - m_new)
            p = jnp.exp(s - m_new)                                 # (tq, tk) f32

            l_sc[:, h:h + 1] = alpha * l_sc[:, h:h + 1] + jnp.sum(
                p, axis=-1, keepdims=True)
            acc_sc[:, sl] = alpha * acc_sc[:, sl] + jnp.dot(
                p.astype(jnp.bfloat16), v, preferred_element_type=jnp.float32)
            m_sc[:, h:h + 1] = m_new

    @pl.when(ki == pl.num_programs(3) - 1)
    def _finalize():
        for h in range(heads_per_blk):
            sl = slice(h * hd, (h + 1) * hd)
            inv_l = pl.reciprocal(l_sc[:, h:h + 1], approx=True)
            o_ref[0, :, sl] = (acc_sc[:, sl] * inv_l).astype(o_ref.dtype)


def pallas_causal_attention_fused(qkv, n_head, *, tile_pref=(512, 256, 128)):
    """qkv: (B, T, 3C) packed c_attn output -> (B, T, C) attention output.

    Heads are grouped so each grid step works on a lane-dense 128-wide slab
    of G = 128 // head_dim consecutive heads, read straight out of qkv via
    column-offset index_maps (offsets 0 / C / 2C) and written straight back
    in head-merged (B, T, C) layout (no JAX-side split / transposes).
    """
    B, T, three_c = qkv.shape
    C = three_c // 3
    hd = C // n_head

    if hd >= 128 or (128 % hd) != 0:
        g = 1
    else:
        g = min(n_head, 128 // hd)
    if n_head % g != 0:
        g = 1
    gw = g * hd                       # lane width of one head group
    n_groups = n_head // g

    tq = _pick_tile(T, tile_pref)
    tk = _pick_tile(T, tile_pref)
    scale = 1.0 / math.sqrt(hd)

    k_base = C // gw                  # column-block offset of K inside qkv
    v_base = (2 * C) // gw            # column-block offset of V inside qkv

    def q_idx(b, gi, qi, ki):
        return (b, qi, gi)

    def kv_idx(base):
        def idx(b, gi, qi, ki):
            # Clamp fully-masked (above-diagonal) kv blocks onto the last block
            # actually used for this q block so their DMA is deduped away.
            kmax = (qi * tq + (tq - 1)) // tk
            return (b, jnp.minimum(ki, kmax), base + gi)
        return idx

    kern = functools.partial(_flash_attn_kernel, scale=scale, tq=tq, tk=tk,
                             heads_per_blk=g, hd=hd)

    return pl.pallas_call(
        kern,
        out_shape=jax.ShapeDtypeStruct((B, T, C), qkv.dtype),
        grid=(B, n_groups, T // tq, T // tk),
        in_specs=[
            pl.BlockSpec((1, tq, gw), q_idx),          # q slab
            pl.BlockSpec((1, tk, gw), kv_idx(k_base)),  # k slab
            pl.BlockSpec((1, tk, gw), kv_idx(v_base)),  # v slab
        ],
        out_specs=pl.BlockSpec((1, tq, gw), q_idx),
        scratch_shapes=[
            pltpu.VMEM((tq, g), jnp.float32),    # running max per head
            pltpu.VMEM((tq, g), jnp.float32),    # running denom per head
            pltpu.VMEM((tq, gw), jnp.float32),   # f32 accumulator (lane-dense)
        ],
        compiler_params=pltpu.CompilerParams(
            dimension_semantics=("parallel", "parallel", "parallel",
                                 "arbitrary"),
            vmem_limit_bytes=_VMEM_LIMIT),
    )(qkv, qkv, qkv)


# ---------------------------------------------------------------------------
# Full module forward
# ---------------------------------------------------------------------------
def causal_self_attention(x, w_attn, b_attn, w_proj, b_proj, n_head):
    """Pallas implementation of CausalSelfAttention.forward.

    x      : (B, T, C)
    w_attn : (C, 3C), b_attn : (3C,)   -- qkv projection (x @ w_attn + b_attn)
    w_proj : (C, C),  b_proj : (C,)    -- output projection
    """
    B, T, C = x.shape

    # c_attn (tiled linear), kept packed as (B, T, 3C) -- no split needed.
    qkv = pallas_linear(x.reshape(B * T, C), w_attn, b_attn)
    qkv = qkv.reshape(B, T, 3 * C)

    # Flash causal attention straight off the packed qkv; output comes back in
    # head-merged (B, T, C) layout, ready for c_proj with zero transposes.
    # TODO(synk): optionally keep qkv/attention activations in bf16 end-to-end
    # to halve HBM traffic (kept f32 here to stay close to module semantics).
    y = pallas_causal_attention_fused(qkv, n_head)            # (B, T, C)

    # c_proj (tiled linear)
    y = pallas_linear(y.reshape(B * T, C), w_proj, b_proj).reshape(B, T, C)
    return y


# ---------------------------------------------------------------------------
# Pure-JAX f32 reference (sanity check against the Pallas path)
# ---------------------------------------------------------------------------
def reference(x, w_attn, b_attn, w_proj, b_proj, n_head):
    B, T, C = x.shape
    hd = C // n_head
    qkv = x @ w_attn + b_attn
    q, k, v = jnp.split(qkv, 3, axis=2)
    q = q.reshape(B, T, n_head, hd).transpose(0, 2, 1, 3)
    k = k.reshape(B, T, n_head, hd).transpose(0, 2, 1, 3)
    v = v.reshape(B, T, n_head, hd).transpose(0, 2, 1, 3)
    att = (q @ jnp.swapaxes(k, -2, -1)) / math.sqrt(hd)
    mask = jnp.tril(jnp.ones((T, T), dtype=bool))
    att = jnp.where(mask, att, -jnp.inf)
    att = jax.nn.softmax(att, axis=-1)
    y = att @ v
    y = y.transpose(0, 2, 1, 3).reshape(B, T, C)
    return y @ w_proj + b_proj


# ---------------------------------------------------------------------------
if __name__ == "__main__":
    # Module-consistent small shapes: B=2, T=1024, n_embed=128, n_head=4
    # (head_dim=32 -> one lane-dense group of 4 heads).  T=1024 with 512-wide
    # q/kv tiles exercises the multi-block online softmax, causal block
    # skipping and the clamped (deduped) k/v DMA path.
    B, T, C, n_head = 2, 1024, 128, 4

    key = jax.random.PRNGKey(0)
    kx, ka, kab, kp, kpb = jax.random.split(key, 5)

    x = jax.random.normal(kx, (B, T, C), dtype=jnp.float32)

    # Deterministic synthetic parameters (PyTorch Linear semantics, stored as
    # (in, out) so the kernel computes x @ w + b).
    scale_attn = 1.0 / math.sqrt(C)
    w_attn = jax.random.uniform(ka, (C, 3 * C), jnp.float32,
                                -scale_attn, scale_attn)
    b_attn = jax.random.uniform(kab, (3 * C,), jnp.float32,
                                -scale_attn, scale_attn)
    w_proj = jax.random.uniform(kp, (C, C), jnp.float32,
                                -scale_attn, scale_attn)
    b_proj = jax.random.uniform(kpb, (C,), jnp.float32,
                                -scale_attn, scale_attn)

    out = causal_self_attention(x, w_attn, b_attn, w_proj, b_proj, n_head)
    out = jax.block_until_ready(out)

    ref = reference(x, w_attn, b_attn, w_proj, b_proj, n_head)
    # Tolerance accounts for bf16 MXU operands (f32 accumulation) and the
    # approx reciprocal in the softmax epilogue vs. the pure-f32 reference.
    np.testing.assert_allclose(np.asarray(out), np.asarray(ref),
                               rtol=2e-2, atol=2e-2)

    print("KERNEL_OK")
</pallas_src>

<mosaic_0001>
module attributes {stable_mosaic.version = 11 : i64} {
  func.func @_linear_kernel_fused(%arg0: i32, %arg1: i32, %arg2: memref<512x128xf32, #tpu.memory_space<vmem>>, %arg3: memref<128x384xf32, #tpu.memory_space<vmem>>, %arg4: memref<1x384xf32, #tpu.memory_space<vmem>>, %arg5: memref<512x384xf32, #tpu.memory_space<vmem>>) attributes {dimension_semantics = [#tpu.dimension_semantics<parallel>, #tpu.dimension_semantics<parallel>], iteration_bounds = array<i64: 4, 1>, scalar_prefetch = 0 : i64, scratch_operands = 0 : i64, tpu.core_type = #tpu.core_type<tc>, window_params = [{transform_indices = @transform_0, window_bounds = array<i64: 512, 128>}, {transform_indices = @transform_1, window_bounds = array<i64: 128, 384>}, {transform_indices = @transform_2, window_bounds = array<i64: 1, 384>}, {transform_indices = @transform_3, window_bounds = array<i64: 512, 384>}]} {
    %c0 = arith.constant 0 : index
    %c0_0 = arith.constant 0 : index
    %0 = vector.load %arg2[%c0, %c0_0] : memref<512x128xf32, #tpu.memory_space<vmem>>, vector<512x128xf32>
    %1 = arith.truncf %0 : vector<512x128xf32> to vector<512x128xbf16>
    %c0_1 = arith.constant 0 : index
    %c0_2 = arith.constant 0 : index
    %2 = vector.load %arg3[%c0_1, %c0_2] : memref<128x384xf32, #tpu.memory_space<vmem>>, vector<128x384xf32>
    %3 = arith.truncf %2 : vector<128x384xf32> to vector<128x384xbf16>
    %cst = arith.constant dense<0.000000e+00> : vector<512x384xf32>
    %4 = tpu.matmul %1, %3, %cst {dimension_numbers = #tpu.dot_dimension_numbers<[1], [0], [0], [1], [0, 0, 1, 1], [], []>} : vector<512x128xbf16>, vector<128x384xbf16>, vector<512x384xf32> -> vector<512x384xf32>
    %c0_3 = arith.constant 0 : index
    %c0_4 = arith.constant 0 : index
    %5 = vector.load %arg4[%c0_3, %c0_4] : memref<1x384xf32, #tpu.memory_space<vmem>>, vector<1x384xf32>
    %6 = vector.broadcast %5 : vector<1x384xf32> to vector<512x384xf32>
    %7 = arith.addf %4, %6 : vector<512x384xf32>
    %c0_5 = arith.constant 0 : index
    %c0_6 = arith.constant 0 : index
    %8 = vector.load %arg5[%c0_5, %c0_6] : memref<512x384xf32, #tpu.memory_space<vmem>>, vector<512x384xf32>
    tpu.vector_store %arg5[%c0_5, %c0_6], %7 {strides = array<i32>} : memref<512x384xf32, #tpu.memory_space<vmem>>, vector<512x384xf32>,
    return
  }
  func.func @transform_0(%arg0: i32, %arg1: i32) -> (i32, i32) {
    %c0_i32 = arith.constant 0 : i32
    %c0_i32_0 = arith.constant 0 : i32
    return %arg0, %c0_i32 : i32, i32
  }
  func.func @transform_1(%arg0: i32, %arg1: i32) -> (i32, i32) {
    %c0_i32 = arith.constant 0 : i32
    %c0_i32_0 = arith.constant 0 : i32
    return %c0_i32, %arg1 : i32, i32
  }
  func.func @transform_2(%arg0: i32, %arg1: i32) -> (i32, i32) {
    %c0_i32 = arith.constant 0 : i32
    %c0_i32_0 = arith.constant 0 : i32
    return %c0_i32, %arg1 : i32, i32
  }
  func.func @transform_3(%arg0: i32, %arg1: i32) -> (i32, i32) {
    %c0_i32 = arith.constant 0 : i32
    return %arg0, %arg1 : i32, i32
  }
}

</mosaic_0001>

<llo_original>
// kernel: tpu_custom_call.1
$region0: #{tpu_custom_call.1}
  #allocation0 [shape = 'u32[]', space=smem, size = 0x4, offset = 0x4, fixed_abs, tag = 'smem constant byte address 0x4 - core index']
  #allocation1 [shape = 'u32[72,128]{1,0:T(1,128)}', space=vmem, size = 0x9000, scoped, tag = 'internal scratch']
  %s0 = inlined_call_operand.hbm [shape: f32[2048,128], index: 0, kind: input, shape index: {}]
  %s1 = inlined_call_operand.hbm [shape: f32[128,384], index: 1, kind: input, shape index: {}]
  %s2 = inlined_call_operand.hbm [shape: f32[1,384], index: 2, kind: input, shape index: {}]
  %s3 = inlined_call_operand.hbm [shape: f32[2048,384], index: 3, kind: output, shape index: {}]
  %s4 = sld [smem:[#allocation0]]
  $region57: #{tpu_custom_call.1} parent=0
    _
  %s6 = ssub.s32 1, %s4
  %s7 = scalar_select 0, %s6, %s4
  $region1: #{tpu_custom_call.1} parent=0
    #allocation2 [shape = 'u8[524288]{0}', space=vmem, size = 0x80000, scoped, tag = 'input window, operand 0']
    #allocation3 [shape = 's32[2]{0}', space=sflag, size = 0x8, scoped, tag = 'scoped memory for tpu_custom_call.1']
    #allocation4 [shape = 's32[2]{0}', space=sflag, size = 0x8, scoped, tag = 'scoped memory for tpu_custom_call.1']
    #allocation5 [shape = 'u8[196608]{0}', space=vmem, size = 0x30000, scoped, tag = 'input window, operand 1, single buffered']
    #allocation6 [shape = 's32[1]{0}', space=sflag, size = 0x4, scoped, tag = 'scoped memory for tpu_custom_call.1']
    #allocation7 [shape = 'u8[1536]{0}', space=vmem, size = 0x800, scoped, tag = 'input window, operand 2, single buffered']
    #allocation8 [shape = 'u8[1572864]{0}', space=vmem, size = 0x180000, scoped, tag = 'output window, operand 0']
    %8 = vsyncpa [#allocation3], 0
    %s9 = scalar_lea.sflag [#allocation3], 1
    %10 = vsyncpa %s9, 0
    %11 = vsyncpa [#allocation6], 0
    %12 = vsyncpa [#allocation4], 0
    %s13 = scalar_lea.sflag [#allocation4], 1
    %14 = vsyncpa %s13, 0
    loop: start=0, step=1, limit=6
    $region2: #{tpu_custom_call.1} parent=1 // loop_pre_header
      _
    $region3: #{tpu_custom_call.1} parent=1 // loop_header
      %s16 = sphi 0, %s20
      %p17 = scmp.ge.s32.totalorder %s16, 6
      %s23 = sphi 0, %s35
      %s24 = sphi 0, %s31
      %s25 = sphi 0, %s23
      %s26 = sphi 0, %s24
      %s27 = sphi 0, %s25
      %s28 = sphi 0, %s26
      %s38 = sphi 0, %s40
      %s41 = sphi 0, %s38
      %s42 = sphi 0, %s41
      %s58 = sphi 0, %s42
      %s64 = sphi 0, %s66
      %s67 = sphi 0, %s64
      %s68 = sphi 0, %s67
      %s84 = sphi 0, %s68
      %s90 = sphi 0, %s92
      %s93 = sphi 0, %s90
      %s94 = sphi 0, %s93
      %s110 = sphi 0, %s94
      %s118 = sphi 0, %s120
      %s121 = sphi 0, %s118
      %s122 = sphi 0, %s121
      %s138 = sphi 0, %s122
    $region4: #{tpu_custom_call.1} parent=1 // loop_header_branch
      %19 = sbr.rel (%p17) target = $region8
    $region5: #{tpu_custom_call.1} parent=1 // loop_body
      %s21 = ssub.s32 %s16, 1
      %s22 = ssub.s32 %s16, 2
      %s29 = sadd.s32 1, %s24
      %p30 = scmp.ge.s32.totalorder %s29, 1
      %s31 = scalar_select %p30, 0, %s29
      %s32 = sadd.s32 1, %s23
      %s33 = scalar_select %p30, %s32, %s23
      %p34 = scmp.ge.s32.totalorder %s33, 4
      %s35 = scalar_select %p34, 0, %s33
      %s36 = ssub.s32 %s23, %s35
      %p37 = scmp.eq.s32.totalorder %s36, 0
      %s39 = sadd.s32 %s38, 1
      %s40 = scalar_select %p37, %s38, %s39
      %p43 = pneg %p37
      %p44 = scmp.eq.s32.totalorder %s16, 3
      %p45 = por %p43, %p44
      %p46 = scmp.ne.s32.totalorder %s38, %s41
      %p47 = scmp.eq.s32.totalorder %s16, 0
      %p48 = por %p46, %p47
      %p49 = scmp.ne.s32.totalorder %s38, %s41
      %p50 = scmp.eq.s32.totalorder %s21, 3
      %p51 = por %p49, %p50
      %p52 = scmp.ne.s32.totalorder %s41, %s42
      %p53 = scmp.eq.s32.totalorder %s21, 0
      %p54 = por %p52, %p53
      %p55 = scmp.ne.s32.totalorder %s41, %s42
      %p56 = scmp.eq.s32.totalorder %s22, 3
      %p57 = por %p55, %p56
      %p59 = scmp.ne.s32.totalorder %s42, %s58
      %p60 = scmp.eq.s32.totalorder %s22, 0
      %p61 = por %p59, %p60
      %s62 = ssub.s32 %s24, %s31
      %p63 = scmp.eq.s32.totalorder %s62, 0
      %s65 = sadd.s32 %s64, 1
      %s66 = scalar_select %p63, %s64, %s65
      %p69 = pneg %p63
      %p70 = scmp.eq.s32.totalorder %s16, 3
      %p71 = por %p69, %p70
      %p72 = scmp.ne.s32.totalorder %s64, %s67
      %p73 = scmp.eq.s32.totalorder %s16, 0
      %p74 = por %p72, %p73
      %p75 = scmp.ne.s32.totalorder %s64, %s67
      %p76 = scmp.eq.s32.totalorder %s21, 3
      %p77 = por %p75, %p76
      %p78 = scmp.ne.s32.totalorder %s67, %s68
      %p79 = scmp.eq.s32.totalorder %s21, 0
      %p80 = por %p78, %p79
      %p81 = scmp.ne.s32.totalorder %s67, %s68
      %p82 = scmp.eq.s32.totalorder %s22, 3
      %p83 = por %p81, %p82
      %p85 = scmp.ne.s32.totalorder %s68, %s84
      %p86 = scmp.eq.s32.totalorder %s22, 0
      %p87 = por %p85, %p86
      %s88 = ssub.s32 %s24, %s31
      %p89 = scmp.eq.s32.totalorder %s88, 0
      %s91 = sadd.s32 %s90, 1
      %s92 = scalar_select %p89, %s90, %s91
      %p95 = pneg %p89
      %p96 = scmp.eq.s32.totalorder %s16, 3
      %p97 = por %p95, %p96
      %p98 = scmp.ne.s32.totalorder %s90, %s93
      %p99 = scmp.eq.s32.totalorder %s16, 0
      %p100 = por %p98, %p99
      %p101 = scmp.ne.s32.totalorder %s90, %s93
      %p102 = scmp.eq.s32.totalorder %s21, 3
      %p103 = por %p101, %p102
      %p104 = scmp.ne.s32.totalorder %s93, %s94
      %p105 = scmp.eq.s32.totalorder %s21, 0
      %p106 = por %p104, %p105
      %p107 = scmp.ne.s32.totalorder %s93, %s94
      %p108 = scmp.eq.s32.totalorder %s22, 3
      %p109 = por %p107, %p108
      %p111 = scmp.ne.s32.totalorder %s94, %s110
      %p112 = scmp.eq.s32.totalorder %s22, 0
      %p113 = por %p111, %p112
      %s114 = ssub.s32 %s23, %s35
      %s115 = ssub.s32 %s24, %s31
      %s116 = sor.u32 %s114, %s115
      %p117 = scmp.eq.s32.totalorder %s116, 0
      %s119 = sadd.s32 %s118, 1
      %s120 = scalar_select %p117, %s118, %s119
      %p123 = pneg %p117
      %p124 = scmp.eq.s32.totalorder %s16, 3
      %p125 = por %p123, %p124
      %p126 = scmp.ne.s32.totalorder %s118, %s121
      %p127 = scmp.eq.s32.totalorder %s16, 0
      %p128 = por %p126, %p127
      %p129 = scmp.ne.s32.totalorder %s118, %s121
      %p130 = scmp.eq.s32.totalorder %s21, 3
      %p131 = por %p129, %p130
      %p132 = scmp.ne.s32.totalorder %s121, %s122
      %p133 = scmp.eq.s32.totalorder %s21, 0
      %p134 = por %p132, %p133
      %p135 = scmp.ne.s32.totalorder %s121, %s122
      %p136 = scmp.eq.s32.totalorder %s22, 3
      %p137 = por %p135, %p136
      %p139 = scmp.ne.s32.totalorder %s122, %s138
      %p140 = scmp.eq.s32.totalorder %s22, 0
      %p141 = por %p139, %p140
      %p142 = scmp.le.s32.totalorder 1, %s16
      %p143 = scmp.lt.s32.totalorder %s16, 5
      %p144 = pnand %p142, %p143
      %p145 = pneg %p144
      // Predicated region
      $region9: #{tpu_custom_call.1} parent=5 // pred_check
        _
      $region10: #{tpu_custom_call.1} parent=5 // pred_check_branch
        %147 = sbr.rel (%p144) target = $region12
      $region11: #{tpu_custom_call.1} parent=5 // pred_region
        %s148 = ssub.s32 %s16, 1
        // Predicated region
        $region13: #{tpu_custom_call.1} parent=11 // pred_check
          %p149 = pneg %p80
        $region14: #{tpu_custom_call.1} parent=11 // pred_check_branch
          %151 = sbr.rel (%p149) target = $region16
        $region15: #{tpu_custom_call.1} parent=11 // pred_region
          %s152 = smul.u32 3, %s26
          %154 = vsyncadd [#allocation6], 0
          %s155 = smul.addr %s152, 8
          %s156 = scalar_lea.hbm %s1, %s155
          %s157 = sshll.u32 %s156, 4
          %s158 = int_to_ptr.hbm [resolvable:$true] %s157
          %s159 = sshll.u32 [#allocation5], 4
          %s160 = int_to_ptr.vmem [resolvable:$true] %s159
          %165 = dma.hbm_to_vmem [thread:$0]  %s158, 6144, %s160, [#allocation6], 384, 384, 24
        $region16: #{tpu_custom_call.1} parent=11 // pred_fallthru
          _
        // Predicated region
        $region17: #{tpu_custom_call.1} parent=11 // pred_check
          %p166 = pneg %p106
        $region18: #{tpu_custom_call.1} parent=11 // pred_check_branch
          %168 = sbr.rel (%p166) target = $region20
        $region19: #{tpu_custom_call.1} parent=11 // pred_region
          %s169 = smul.u32 3, %s26
          %171 = vsyncadd [#allocation6], 0
          %s172 = scalar_lea.hbm %s2, %s169
          %s174 = sshll.u32 %s172, 4
          %s175 = int_to_ptr.hbm [resolvable:$true] %s174
          %s176 = sshll.u32 [#allocation7], 4
          %s177 = int_to_ptr.vmem [resolvable:$true] %s176
          %179 = dma.hbm_to_vmem [thread:$0]  %s175, 48, %s177, [#allocation6]
        $region20: #{tpu_custom_call.1} parent=11 // pred_fallthru
          _
      $region12: #{tpu_custom_call.1} parent=5 // pred_fallthru
        _
      %p180 = scmp.lt.s32.totalorder %s16, 4
      // Predicated region
      $region21: #{tpu_custom_call.1} parent=5 // pred_check
        %p181 = pneg %p180
      $region22: #{tpu_custom_call.1} parent=5 // pred_check_branch
        %183 = sbr.rel (%p181) target = $region24
      $region23: #{tpu_custom_call.1} parent=5 // pred_region
        // Predicated region
        $region25: #{tpu_custom_call.1} parent=23 // pred_check
          %p184 = pneg %p48
        $region26: #{tpu_custom_call.1} parent=23 // pred_check_branch
          %186 = sbr.rel (%p184) target = $region28
        $region27: #{tpu_custom_call.1} parent=23 // pred_region
          %s187 = sand.u32 %s38, 1
          %s188 = scalar_lea.sflag [#allocation3], %s187
          %s189 = sand.u32 %s38, 1
          %s190 = smul.addr %s189, 512
          %s191 = scalar_lea.vmem [#allocation2], %s190
          %s192 = smul.u32 64, %s23
          %194 = vsyncadd %s188, 0
          %s195 = smul.addr %s192, 8
          %s196 = scalar_lea.hbm %s0, %s195
          %s197 = sshll.u32 %s196, 4
          %s198 = int_to_ptr.hbm [resolvable:$true] %s197
          %s199 = sshll.u32 %s191, 4
          %s200 = int_to_ptr.vmem [resolvable:$true] %s199
          %205 = dma.hbm_to_vmem [thread:$0]  %s198, 8192, %s200, %s188, 128, 128, 8
        $region28: #{tpu_custom_call.1} parent=23 // pred_fallthru
          _
      $region24: #{tpu_custom_call.1} parent=5 // pred_fallthru
        _
      %p206 = scmp.le.s32.totalorder 1, %s16
      %p207 = scmp.lt.s32.totalorder %s16, 5
      %p208 = pnand %p206, %p207
      %p209 = pneg %p208
      // Predicated region
      $region29: #{tpu_custom_call.1} parent=5 // pred_check
        _
      $region30: #{tpu_custom_call.1} parent=5 // pred_check_branch
        %211 = sbr.rel (%p208) target = $region32
      $region31: #{tpu_custom_call.1} parent=5 // pred_region
        %s212 = ssub.s32 %s16, 1
        %s213 = sand.u32 %s41, 1
        %s214 = scalar_lea.sflag [#allocation3], %s213
        %s215 = sand.u32 %s41, 1
        %s216 = smul.addr %s215, 512
        %s217 = scalar_lea.vmem [#allocation2], %s216
        // Predicated region
        $region33: #{tpu_custom_call.1} parent=31 // pred_check
          %p218 = pneg %p54
        $region34: #{tpu_custom_call.1} parent=31 // pred_check_branch
          %220 = sbr.rel (%p218) target = $region36
        $region35: #{tpu_custom_call.1} parent=31 // pred_region
          %222 = dma.done %s214, 8192
        $region36: #{tpu_custom_call.1} parent=31 // pred_fallthru
          _
        // Predicated region
        $region37: #{tpu_custom_call.1} parent=31 // pred_check
          %p223 = pneg %p80
        $region38: #{tpu_custom_call.1} parent=31 // pred_check_branch
          %225 = sbr.rel (%p223) target = $region40
        $region39: #{tpu_custom_call.1} parent=31 // pred_region
          %227 = dma.done [#allocation6], 6144
        $region40: #{tpu_custom_call.1} parent=31 // pred_fallthru
          _
        // Predicated region
        $region41: #{tpu_custom_call.1} parent=31 // pred_check
          %p228 = pneg %p106
        $region42: #{tpu_custom_call.1} parent=31 // pred_check_branch
          %230 = sbr.rel (%p228) target = $region44
        $region43: #{tpu_custom_call.1} parent=31 // pred_region
          %232 = dma.done [#allocation6], 48
        $region44: #{tpu_custom_call.1} parent=31 // pred_fallthru
          _
        %s233 = sand.u32 %s41, 1
        %s234 = scalar_lea.sflag [#allocation3], %s233
        %s235 = sand.u32 %s41, 1
        %s236 = smul.addr %s235, 512
        %s237 = scalar_lea.vmem [#allocation2], %s236
        %p238 = pneg %p54
        %p239 = pneg %p51
        %p240 = pneg %p80
        %p241 = pneg %p77
        %p242 = pneg %p106
        %p243 = pneg %p103
        %p244 = pneg %p134
        %p245 = pneg %p131
        %s246 = sand.u32 %s121, 1
        %s247 = scalar_lea.sflag [#allocation4], %s246
        %s248 = sand.u32 %s121, 1
        %s249 = smul.addr %s248, 1536
        %s250 = scalar_lea.vmem [#allocation8], %s249
        %s251 = smul.u32 64, %s25
        %s252 = smul.u32 3, %s26
        %s253 = smul.u32 3, %s26
        %s254 = smul.u32 64, %s25
        %s255 = smul.u32 3, %s26
        %v256 = vld [vmem:[%s217] sm:$0xff]
        %v257 = vld [vmem:[%s217 + $0x8] sm:$0xff]
        %v258 = vld [vmem:[%s217 + $0x10] sm:$0xff]
        %v259 = vld [vmem:[%s217 + $0x18] sm:$0xff]
        %v260 = vld [vmem:[%s217 + $0x20] sm:$0xff]
        %v261 = vld [vmem:[%s217 + $0x28] sm:$0xff]
        %v262 = vld [vmem:[%s217 + $0x30] sm:$0xff]
        %v263 = vld [vmem:[%s217 + $0x38] sm:$0xff]
        %v264 = vld [vmem:[%s217 + $0x40] sm:$0xff]
        %v265 = vld [vmem:[%s217 + $0x48] sm:$0xff]
        %v266 = vld [vmem:[%s217 + $0x50] sm:$0xff]
        %v267 = vld [vmem:[%s217 + $0x58] sm:$0xff]
        %v268 = vld [vmem:[%s217 + $0x60] sm:$0xff]
        %v269 = vld [vmem:[%s217 + $0x68] sm:$0xff]
        %v270 = vld [vmem:[%s217 + $0x70] sm:$0xff]
        %v271 = vld [vmem:[%s217 + $0x78] sm:$0xff]
        %v272 = vld [vmem:[%s217 + $0x80] sm:$0xff]
        %v273 = vld [vmem:[%s217 + $0x88] sm:$0xff]
        %v274 = vld [vmem:[%s217 + $0x90] sm:$0xff]
        %v275 = vld [vmem:[%s217 + $0x98] sm:$0xff]
        %v276 = vld [vmem:[%s217 + $0xa0] sm:$0xff]
        %v277 = vld [vmem:[%s217 + $0xa8] sm:$0xff]
        %v278 = vld [vmem:[%s217 + $0xb0] sm:$0xff]
        %v279 = vld [vmem:[%s217 + $0xb8] sm:$0xff]
        %v280 = vld [vmem:[%s217 + $0xc0] sm:$0xff]
        %v281 = vld [vmem:[%s217 + $0xc8] sm:$0xff]
        %v282 = vld [vmem:[%s217 + $0xd0] sm:$0xff]
        %v283 = vld [vmem:[%s217 + $0xd8] sm:$0xff]
        %v284 = vld [vmem:[%s217 + $0xe0] sm:$0xff]
        %v285 = vld [vmem:[%s217 + $0xe8] sm:$0xff]
        %v286 = vld [vmem:[%s217 + $0xf0] sm:$0xff]
        %v287 = vld [vmem:[%s217 + $0xf8] sm:$0xff]
        %v288 = vld [vmem:[%s217 + $0x100] sm:$0xff]
        %v289 = vld [vmem:[%s217 + $0x108] sm:$0xff]
        %v290 = vld [vmem:[%s217 + $0x110] sm:$0xff]
        %v291 = vld [vmem:[%s217 + $0x118] sm:$0xff]
        %v292 = vld [vmem:[%s217 + $0x120] sm:$0xff]
        %v293 = vld [vmem:[%s217 + $0x128] sm:$0xff]
        %v294 = vld [vmem:[%s217 + $0x130] sm:$0xff]
        %v295 = vld [vmem:[%s217 + $0x138] sm:$0xff]
        %v296 = vld [vmem:[%s217 + $0x140] sm:$0xff]
        %v297 = vld [vmem:[%s217 + $0x148] sm:$0xff]
        %v298 = vld [vmem:[%s217 + $0x150] sm:$0xff]
        %v299 = vld [vmem:[%s217 + $0x158] sm:$0xff]
        %v300 = vld [vmem:[%s217 + $0x160] sm:$0xff]
        %v301 = vld [vmem:[%s217 + $0x168] sm:$0xff]
        %v302 = vld [vmem:[%s217 + $0x170] sm:$0xff]
        %v303 = vld [vmem:[%s217 + $0x178] sm:$0xff]
        %v304 = vld [vmem:[%s217 + $0x180] sm:$0xff]
        %v305 = vld [vmem:[%s217 + $0x188] sm:$0xff]
        %v306 = vld [vmem:[%s217 + $0x190] sm:$0xff]
        %v307 = vld [vmem:[%s217 + $0x198] sm:$0xff]
        %v308 = vld [vmem:[%s217 + $0x1a0] sm:$0xff]
        %v309 = vld [vmem:[%s217 + $0x1a8] sm:$0xff]
        %v310 = vld [vmem:[%s217 + $0x1b0] sm:$0xff]
        %v311 = vld [vmem:[%s217 + $0x1b8] sm:$0xff]
        %v312 = vld [vmem:[%s217 + $0x1c0] sm:$0xff]
        %v313 = vld [vmem:[%s217 + $0x1c8] sm:$0xff]
        %v314 = vld [vmem:[%s217 + $0x1d0] sm:$0xff]
        %v315 = vld [vmem:[%s217 + $0x1d8] sm:$0xff]
        %v316 = vld [vmem:[%s217 + $0x1e0] sm:$0xff]
        %v317 = vld [vmem:[%s217 + $0x1e8] sm:$0xff]
        %v318 = vld [vmem:[%s217 + $0x1f0] sm:$0xff]
        %v319 = vld [vmem:[%s217 + $0x1f8] sm:$0xff]
        %v320 = vpack.c.bf16 %v257, %v256
        %v321 = vpack.c.bf16 %v259, %v258
        %v322 = vpack.c.bf16 %v261, %v260
        %v323 = vpack.c.bf16 %v263, %v262
        %v324 = vpack.c.bf16 %v265, %v264
        %v325 = vpack.c.bf16 %v267, %v266
        %v326 = vpack.c.bf16 %v269, %v268
        %v327 = vpack.c.bf16 %v271, %v270
        %v328 = vpack.c.bf16 %v273, %v272
        %v329 = vpack.c.bf16 %v275, %v274
        %v330 = vpack.c.bf16 %v277, %v276
        %v331 = vpack.c.bf16 %v279, %v278
        %v332 = vpack.c.bf16 %v281, %v280
        %v333 = vpack.c.bf16 %v283, %v282
        %v334 = vpack.c.bf16 %v285, %v284
        %v335 = vpack.c.bf16 %v287, %v286
        %v336 = vpack.c.bf16 %v289, %v288
        %v337 = vpack.c.bf16 %v291, %v290
        %v338 = vpack.c.bf16 %v293, %v292
        %v339 = vpack.c.bf16 %v295, %v294
        %v340 = vpack.c.bf16 %v297, %v296
        %v341 = vpack.c.bf16 %v299, %v298
        %v342 = vpack.c.bf16 %v301, %v300
        %v343 = vpack.c.bf16 %v303, %v302
        %v344 = vpack.c.bf16 %v305, %v304
        %v345 = vpack.c.bf16 %v307, %v306
        %v346 = vpack.c.bf16 %v309, %v308
        %v347 = vpack.c.bf16 %v311, %v310
        %v348 = vpack.c.bf16 %v313, %v312
        %v349 = vpack.c.bf16 %v315, %v314
        %v350 = vpack.c.bf16 %v317, %v316
        %v351 = vpack.c.bf16 %v319, %v318
        %v352 = vld [vmem:[#allocation5] sm:$0xff]
        %v353 = vld [vmem:[#allocation5 + $0x8] sm:$0xff]
        %v354 = vld [vmem:[#allocation5 + $0x10] sm:$0xff]
        %v355 = vld [vmem:[#allocation5 + $0x18] sm:$0xff]
        %v356 = vld [vmem:[#allocation5 + $0x20] sm:$0xff]
        %v357 = vld [vmem:[#allocation5 + $0x28] sm:$0xff]
        %v358 = vld [vmem:[#allocation5 + $0x30] sm:$0xff]
        %v359 = vld [vmem:[#allocation5 + $0x38] sm:$0xff]
        %v360 = vld [vmem:[#allocation5 + $0x40] sm:$0xff]
        %v361 = vld [vmem:[#allocation5 + $0x48] sm:$0xff]
        %v362 = vld [vmem:[#allocation5 + $0x50] sm:$0xff]
        %v363 = vld [vmem:[#allocation5 + $0x58] sm:$0xff]
        %v364 = vld [vmem:[#allocation5 + $0x60] sm:$0xff]
        %v365 = vld [vmem:[#allocation5 + $0x68] sm:$0xff]
        %v366 = vld [vmem:[#allocation5 + $0x70] sm:$0xff]
        %v367 = vld [vmem:[#allocation5 + $0x78] sm:$0xff]
        %v368 = vld [vmem:[#allocation5 + $0x80] sm:$0xff]
        %v369 = vld [vmem:[#allocation5 + $0x88] sm:$0xff]
        %v370 = vld [vmem:[#allocation5 + $0x90] sm:$0xff]
        %v371 = vld [vmem:[#allocation5 + $0x98] sm:$0xff]
        %v372 = vld [vmem:[#allocation5 + $0xa0] sm:$0xff]
        %v373 = vld [vmem:[#allocation5 + $0xa8] sm:$0xff]
        %v374 = vld [vmem:[#allocation5 + $0xb0] sm:$0xff]
        %v375 = vld [vmem:[#allocation5 + $0xb8] sm:$0xff]
        %v376 = vld [vmem:[#allocation5 + $0xc0] sm:$0xff]
        %v377 = vld [vmem:[#allocation5 + $0xc8] sm:$0xff]
        %v378 = vld [vmem:[#allocation5 + $0xd0] sm:$0xff]
        %v379 = vld [vmem:[#allocation5 + $0xd8] sm:$0xff]
        %v380 = vld [vmem:[#allocation5 + $0xe0] sm:$0xff]
        %v381 = vld [vmem:[#allocation5 + $0xe8] sm:$0xff]
        %v382 = vld [vmem:[#allocation5 + $0xf0] sm:$0xff]
        %v383 = vld [vmem:[#allocation5 + $0xf8] sm:$0xff]
        %v384 = vld [vmem:[#allocation5 + $0x100] sm:$0xff]
        %v385 = vld [vmem:[#allocation5 + $0x108] sm:$0xff]
        %v386 = vld [vmem:[#allocation5 + $0x110] sm:$0xff]
        %v387 = vld [vmem:[#allocation5 + $0x118] sm:$0xff]
        %v388 = vld [vmem:[#allocation5 + $0x120] sm:$0xff]
        %v389 = vld [vmem:[#allocation5 + $0x128] sm:$0xff]
        %v390 = vld [vmem:[#allocation5 + $0x130] sm:$0xff]
        %v391 = vld [vmem:[#allocation5 + $0x138] sm:$0xff]
        %v392 = vld [vmem:[#allocation5 + $0x140] sm:$0xff]
        %v393 = vld [vmem:[#allocation5 + $0x148] sm:$0xff]
        %v394 = vld [vmem:[#allocation5 + $0x150] sm:$0xff]
        %v395 = vld [vmem:[#allocation5 + $0x158] sm:$0xff]
        %v396 = vld [vmem:[#allocation5 + $0x160] sm:$0xff]
        %v397 = vld [vmem:[#allocation5 + $0x168] sm:$0xff]
        %v398 = vld [vmem:[#allocation5 + $0x170] sm:$0xff]
        %v399 = vld [vmem:[#allocation5 + $0x178] sm:$0xff]
        %v400 = vpack.c.bf16 %v355, %v352
        %v401 = vpack.c.bf16 %v356, %v353
        %v402 = vpack.c.bf16 %v357, %v354
        %v403 = vpack.c.bf16 %v361, %v358
        %v404 = vpack.c.bf16 %v362, %v359
        %v405 = vpack.c.bf16 %v363, %v360
        %v406 = vpack.c.bf16 %v367, %v364
        %v407 = vpack.c.bf16 %v368, %v365
        %v408 = vpack.c.bf16 %v369, %v366
        %v409 = vpack.c.bf16 %v373, %v370
        %v410 = vpack.c.bf16 %v374, %v371
        %v411 = vpack.c.bf16 %v375, %v372
        %v412 = vpack.c.bf16 %v379, %v376
        %v413 = vpack.c.bf16 %v380, %v377
        %v414 = vpack.c.bf16 %v381, %v378
        %v415 = vpack.c.bf16 %v385, %v382
        %v416 = vpack.c.bf16 %v386, %v383
        %v417 = vpack.c.bf16 %v387, %v384
        %v418 = vpack.c.bf16 %v391, %v388
        %v419 = vpack.c.bf16 %v392, %v389
        %v420 = vpack.c.bf16 %v393, %v390
        %v421 = vpack.c.bf16 %v397, %v394
        %v422 = vpack.c.bf16 %v398, %v395
        %v423 = vpack.c.bf16 %v399, %v396
        %v424 = vld [vmem:[#allocation7] sm:$0x7]
        %v426 = vperm.slane %v424, 0
        %v427 = vperm.slane %v424, 1
        %v428 = vperm.slane %v424, 2
        %432 = vmatpush.bf16.msra.mxu0 %v421
        %433 = vmatpush.bf16.msra.mxu0 %v418
        %434 = vmatpush.bf16.msra.mxu0 %v415
        %435 = vmatpush.bf16.msra.mxu0 %v412
        %436 = vmatpush.bf16.msra.mxu0 %v409
        %437 = vmatpush.bf16.msra.mxu0 %v406
        %438 = vmatpush.bf16.msra.mxu0 %v403
        %439 = vmatpush.bf16.msra.mxu0 %v400
        %440 = vmatmul.bf16.gmra.mxu0 %v320
        %v441 = vpop.f32.mrf.mxu0
        %v442 = vadd.f32 %v426, %v441
        %v443 = vpop.f32.mrf.mxu0
        %v444 = vadd.f32 %v426, %v443
        %445 = vmatmul.bf16.gmra.mxu0 %v321
        %v446 = vpop.f32.mrf.mxu0
        %v447 = vadd.f32 %v426, %v446
        %v448 = vpop.f32.mrf.mxu0
        %v449 = vadd.f32 %v426, %v448
        %450 = vmatmul.bf16.gmra.mxu0 %v322
        %v451 = vpop.f32.mrf.mxu0
        %v452 = vadd.f32 %v426, %v451
        %v453 = vpop.f32.mrf.mxu0
        %v454 = vadd.f32 %v426, %v453
        %455 = vmatmul.bf16.gmra.mxu0 %v323
        %v456 = vpop.f32.mrf.mxu0
        %v457 = vadd.f32 %v426, %v456
        %v458 = vpop.f32.mrf.mxu0
        %v459 = vadd.f32 %v426, %v458
        %460 = vmatmul.bf16.gmra.mxu0 %v324
        %v461 = vpop.f32.mrf.mxu0
        %v462 = vadd.f32 %v426, %v461
        %v463 = vpop.f32.mrf.mxu0
        %v464 = vadd.f32 %v426, %v463
        %465 = vmatmul.bf16.gmra.mxu0 %v325
        %v466 = vpop.f32.mrf.mxu0
        %v467 = vadd.f32 %v426, %v466
        %v468 = vpop.f32.mrf.mxu0
        %v469 = vadd.f32 %v426, %v468
        %470 = vmatmul.bf16.gmra.mxu0 %v326
        %v471 = vpop.f32.mrf.mxu0
        %v472 = vadd.f32 %v426, %v471
        %v473 = vpop.f32.mrf.mxu0
        %v474 = vadd.f32 %v426, %v473
        %475 = vmatmul.bf16.gmra.mxu0 %v327
        %v476 = vpop.f32.mrf.mxu0
        %v477 = vadd.f32 %v426, %v476
        %v478 = vpop.f32.mrf.mxu0
        %v479 = vadd.f32 %v426, %v478
        %480 = vmatmul.bf16.gmra.mxu0 %v328
        %v481 = vpop.f32.mrf.mxu0
        %v482 = vadd.f32 %v426, %v481
        %v483 = vpop.f32.mrf.mxu0
        %v484 = vadd.f32 %v426, %v483
        %485 = vmatmul.bf16.gmra.mxu0 %v329
        %v486 = vpop.f32.mrf.mxu0
        %v487 = vadd.f32 %v426, %v486
        %v488 = vpop.f32.mrf.mxu0
        %v489 = vadd.f32 %v426, %v488
        %490 = vmatmul.bf16.gmra.mxu0 %v330
        %v491 = vpop.f32.mrf.mxu0
        %v492 = vadd.f32 %v426, %v491
        %v493 = vpop.f32.mrf.mxu0
        %v494 = vadd.f32 %v426, %v493
        %495 = vmatmul.bf16.gmra.mxu0 %v331
        %v496 = vpop.f32.mrf.mxu0
        %v497 = vadd.f32 %v426, %v496
        %v498 = vpop.f32.mrf.mxu0
        %v499 = vadd.f32 %v426, %v498
        %500 = vmatmul.bf16.gmra.mxu0 %v332
        %v501 = vpop.f32.mrf.mxu0
        %v502 = vadd.f32 %v426, %v501
        %v503 = vpop.f32.mrf.mxu0
        %v504 = vadd.f32 %v426, %v503
        %505 = vmatmul.bf16.gmra.mxu0 %v333
        %v506 = vpop.f32.mrf.mxu0
        %v507 = vadd.f32 %v426, %v506
        %v508 = vpop.f32.mrf.mxu0
        %v509 = vadd.f32 %v426, %v508
        %510 = vmatmul.bf16.gmra.mxu0 %v334
        %v511 = vpop.f32.mrf.mxu0
        %v512 = vadd.f32 %v426, %v511
        %v513 = vpop.f32.mrf.mxu0
        %v514 = vadd.f32 %v426, %v513
        %515 = vmatmul.bf16.gmra.mxu0 %v335
        %v516 = vpop.f32.mrf.mxu0
        %v517 = vadd.f32 %v426, %v516
        %v518 = vpop.f32.mrf.mxu0
        %v519 = vadd.f32 %v426, %v518
        %520 = vmatmul.bf16.gmra.mxu0 %v336
        %v521 = vpop.f32.mrf.mxu0
        %v522 = vadd.f32 %v426, %v521
        %v523 = vpop.f32.mrf.mxu0
        %v524 = vadd.f32 %v426, %v523
        %525 = vmatmul.bf16.gmra.mxu0 %v337
        %v526 = vpop.f32.mrf.mxu0
        %v527 = vadd.f32 %v426, %v526
        %v528 = vpop.f32.mrf.mxu0
        %v529 = vadd.f32 %v426, %v528
        %530 = vmatmul.bf16.gmra.mxu0 %v338
        %v531 = vpop.f32.mrf.mxu0
        %v532 = vadd.f32 %v426, %v531
        %v533 = vpop.f32.mrf.mxu0
        %v534 = vadd.f32 %v426, %v533
        %535 = vmatmul.bf16.gmra.mxu0 %v339
        %v536 = vpop.f32.mrf.mxu0
        %v537 = vadd.f32 %v426, %v536
        %v538 = vpop.f32.mrf.mxu0
        %v539 = vadd.f32 %v426, %v538
        %540 = vmatmul.bf16.gmra.mxu0 %v340
        %v541 = vpop.f32.mrf.mxu0
        %v542 = vadd.f32 %v426, %v541
        %v543 = vpop.f32.mrf.mxu0
        %v544 = vadd.f32 %v426, %v543
        %545 = vmatmul.bf16.gmra.mxu0 %v341
        %v546 = vpop.f32.mrf.mxu0
        %v547 = vadd.f32 %v426, %v546
        %v548 = vpop.f32.mrf.mxu0
        %v549 = vadd.f32 %v426, %v548
        %550 = vmatmul.bf16.gmra.mxu0 %v342
        %v551 = vpop.f32.mrf.mxu0
        %v552 = vadd.f32 %v426, %v551
        %v553 = vpop.f32.mrf.mxu0
        %v554 = vadd.f32 %v426, %v553
        %555 = vmatmul.bf16.gmra.mxu0 %v343
        %v556 = vpop.f32.mrf.mxu0
        %v557 = vadd.f32 %v426, %v556
        %v558 = vpop.f32.mrf.mxu0
        %v559 = vadd.f32 %v426, %v558
        %560 = vmatmul.bf16.gmra.mxu0 %v344
        %v561 = vpop.f32.mrf.mxu0
        %v562 = vadd.f32 %v426, %v561
        %v563 = vpop.f32.mrf.mxu0
        %v564 = vadd.f32 %v426, %v563
        %565 = vmatmul.bf16.gmra.mxu0 %v345
        %v566 = vpop.f32.mrf.mxu0
        %v567 = vadd.f32 %v426, %v566
        %v568 = vpop.f32.mrf.mxu0
        %v569 = vadd.f32 %v426, %v568
        %570 = vmatmul.bf16.gmra.mxu0 %v346
        %v571 = vpop.f32.mrf.mxu0
        %v572 = vadd.f32 %v426, %v571
        %v573 = vpop.f32.mrf.mxu0
        %v574 = vadd.f32 %v426, %v573
        %575 = vmatmul.bf16.gmra.mxu0 %v347
        %v576 = vpop.f32.mrf.mxu0
        %v577 = vadd.f32 %v426, %v576
        %v578 = vpop.f32.mrf.mxu0
        %v579 = vadd.f32 %v426, %v578
        %580 = vmatmul.bf16.gmra.mxu0 %v348
        %v581 = vpop.f32.mrf.mxu0
        %v582 = vadd.f32 %v426, %v581
        %v583 = vpop.f32.mrf.mxu0
        %v584 = vadd.f32 %v426, %v583
        %585 = vmatmul.bf16.gmra.mxu0 %v349
        %v586 = vpop.f32.mrf.mxu0
        %v587 = vadd.f32 %v426, %v586
        %v588 = vpop.f32.mrf.mxu0
        %v589 = vadd.f32 %v426, %v588
        %590 = vmatmul.bf16.gmra.mxu0 %v350
        %v591 = vpop.f32.mrf.mxu0
        %v592 = vadd.f32 %v426, %v591
        %v593 = vpop.f32.mrf.mxu0
        %v594 = vadd.f32 %v426, %v593
        %595 = vmatmul.bf16.gmra.mxu0 %v351
        %v596 = vpop.f32.mrf.mxu0
        %v597 = vadd.f32 %v426, %v596
        %v598 = vpop.f32.mrf.mxu0
        %v599 = vadd.f32 %v426, %v598
        %600 = vdwg.mxu0
        %601 = vmatpush.bf16.msra.mxu0 %v422
        %602 = vmatpush.bf16.msra.mxu0 %v419
        %603 = vmatpush.bf16.msra.mxu0 %v416
        %604 = vmatpush.bf16.msra.mxu0 %v413
        %605 = vmatpush.bf16.msra.mxu0 %v410
        %606 = vmatpush.bf16.msra.mxu0 %v407
        %607 = vmatpush.bf16.msra.mxu0 %v404
        %608 = vmatpush.bf16.msra.mxu0 %v401
        %609 = vmatmul.bf16.gmra.mxu0 %v320
        %v610 = vpop.f32.mrf.mxu0
        %v611 = vadd.f32 %v427, %v610
        %v612 = vpop.f32.mrf.mxu0
        %v613 = vadd.f32 %v427, %v612
        %614 = vmatmul.bf16.gmra.mxu0 %v321
        %v615 = vpop.f32.mrf.mxu0
        %v616 = vadd.f32 %v427, %v615
        %v617 = vpop.f32.mrf.mxu0
        %v618 = vadd.f32 %v427, %v617
        %619 = vmatmul.bf16.gmra.mxu0 %v322
        %v620 = vpop.f32.mrf.mxu0
        %v621 = vadd.f32 %v427, %v620
        %v622 = vpop.f32.mrf.mxu0
        %v623 = vadd.f32 %v427, %v622
        %624 = vmatmul.bf16.gmra.mxu0 %v323
        %v625 = vpop.f32.mrf.mxu0
        %v626 = vadd.f32 %v427, %v625
        %v627 = vpop.f32.mrf.mxu0
        %v628 = vadd.f32 %v427, %v627
        %629 = vmatmul.bf16.gmra.mxu0 %v324
        %v630 = vpop.f32.mrf.mxu0
        %v631 = vadd.f32 %v427, %v630
        %v632 = vpop.f32.mrf.mxu0
        %v633 = vadd.f32 %v427, %v632
        %634 = vmatmul.bf16.gmra.mxu0 %v325
        %v635 = vpop.f32.mrf.mxu0
        %v636 = vadd.f32 %v427, %v635
        %v637 = vpop.f32.mrf.mxu0
        %v638 = vadd.f32 %v427, %v637
        %639 = vmatmul.bf16.gmra.mxu0 %v326
        %v640 = vpop.f32.mrf.mxu0
        %v641 = vadd.f32 %v427, %v640
        %v642 = vpop.f32.mrf.mxu0
        %v643 = vadd.f32 %v427, %v642
        %644 = vmatmul.bf16.gmra.mxu0 %v327
        %v645 = vpop.f32.mrf.mxu0
        %v646 = vadd.f32 %v427, %v645
        %v647 = vpop.f32.mrf.mxu0
        %v648 = vadd.f32 %v427, %v647
        %649 = vmatmul.bf16.gmra.mxu0 %v328
        %v650 = vpop.f32.mrf.mxu0
        %v651 = vadd.f32 %v427, %v650
        %v652 = vpop.f32.mrf.mxu0
        %v653 = vadd.f32 %v427, %v652
        %654 = vmatmul.bf16.gmra.mxu0 %v329
        %v655 = vpop.f32.mrf.mxu0
        %v656 = vadd.f32 %v427, %v655
        %v657 = vpop.f32.mrf.mxu0
        %v658 = vadd.f32 %v427, %v657
        %659 = vmatmul.bf16.gmra.mxu0 %v330
        %v660 = vpop.f32.mrf.mxu0
        %v661 = vadd.f32 %v427, %v660
        %v662 = vpop.f32.mrf.mxu0
        %v663 = vadd.f32 %v427, %v662
        %664 = vmatmul.bf16.gmra.mxu0 %v331
        %v665 = vpop.f32.mrf.mxu0
        %v666 = vadd.f32 %v427, %v665
        %v667 = vpop.f32.mrf.mxu0
        %v668 = vadd.f32 %v427, %v667
        %669 = vmatmul.bf16.gmra.mxu0 %v332
        %v670 = vpop.f32.mrf.mxu0
        %v671 = vadd.f32 %v427, %v670
        %v672 = vpop.f32.mrf.mxu0
        %v673 = vadd.f32 %v427, %v672
        %674 = vmatmul.bf16.gmra.mxu0 %v333
        %v675 = vpop.f32.mrf.mxu0
        %v676 = vadd.f32 %v427, %v675
        %v677 = vpop.f32.mrf.mxu0
        %v678 = vadd.f32 %v427, %v677
        %679 = vmatmul.bf16.gmra.mxu0 %v334
        %v680 = vpop.f32.mrf.mxu0
        %v681 = vadd.f32 %v427, %v680
        %v682 = vpop.f32.mrf.mxu0
        %v683 = vadd.f32 %v427, %v682
        %684 = vmatmul.bf16.gmra.mxu0 %v335
        %v685 = vpop.f32.mrf.mxu0
        %v686 = vadd.f32 %v427, %v685
        %v687 = vpop.f32.mrf.mxu0
        %v688 = vadd.f32 %v427, %v687
        %689 = vmatmul.bf16.gmra.mxu0 %v336
        %v690 = vpop.f32.mrf.mxu0
        %v691 = vadd.f32 %v427, %v690
        %v692 = vpop.f32.mrf.mxu0
        %v693 = vadd.f32 %v427, %v692
        %694 = vmatmul.bf16.gmra.mxu0 %v337
        %v695 = vpop.f32.mrf.mxu0
        %v696 = vadd.f32 %v427, %v695
        %v697 = vpop.f32.mrf.mxu0
        %v698 = vadd.f32 %v427, %v697
        %699 = vmatmul.bf16.gmra.mxu0 %v338
        %v700 = vpop.f32.mrf.mxu0
        %v701 = vadd.f32 %v427, %v700
        %v702 = vpop.f32.mrf.mxu0
        %v703 = vadd.f32 %v427, %v702
        %704 = vmatmul.bf16.gmra.mxu0 %v339
        %v705 = vpop.f32.mrf.mxu0
        %v706 = vadd.f32 %v427, %v705
        %v707 = vpop.f32.mrf.mxu0
        %v708 = vadd.f32 %v427, %v707
        %709 = vmatmul.bf16.gmra.mxu0 %v340
        %v710 = vpop.f32.mrf.mxu0
        %v711 = vadd.f32 %v427, %v710
        %v712 = vpop.f32.mrf.mxu0
        %v713 = vadd.f32 %v427, %v712
        %714 = vmatmul.bf16.gmra.mxu0 %v341
        %v715 = vpop.f32.mrf.mxu0
        %v716 = vadd.f32 %v427, %v715
        %v717 = vpop.f32.mrf.mxu0
        %v718 = vadd.f32 %v427, %v717
        %719 = vmatmul.bf16.gmra.mxu0 %v342
        %v720 = vpop.f32.mrf.mxu0
        %v721 = vadd.f32 %v427, %v720
        %v722 = vpop.f32.mrf.mxu0
        %v723 = vadd.f32 %v427, %v722
        %724 = vmatmul.bf16.gmra.mxu0 %v343
        %v725 = vpop.f32.mrf.mxu0
        %v726 = vadd.f32 %v427, %v725
        %v727 = vpop.f32.mrf.mxu0
        %v728 = vadd.f32 %v427, %v727
        %729 = vmatmul.bf16.gmra.mxu0 %v344
        %v730 = vpop.f32.mrf.mxu0
        %v731 = vadd.f32 %v427, %v730
        %v732 = vpop.f32.mrf.mxu0
        %v733 = vadd.f32 %v427, %v732
        %734 = vmatmul.bf16.gmra.mxu0 %v345
        %v735 = vpop.f32.mrf.mxu0
        %v736 = vadd.f32 %v427, %v735
        %v737 = vpop.f32.mrf.mxu0
        %v738 = vadd.f32 %v427, %v737
        %739 = vmatmul.bf16.gmra.mxu0 %v346
        %v740 = vpop.f32.mrf.mxu0
        %v741 = vadd.f32 %v427, %v740
        %v742 = vpop.f32.mrf.mxu0
        %v743 = vadd.f32 %v427, %v742
        %744 = vmatmul.bf16.gmra.mxu0 %v347
        %v745 = vpop.f32.mrf.mxu0
        %v746 = vadd.f32 %v427, %v745
        %v747 = vpop.f32.mrf.mxu0
        %v748 = vadd.f32 %v427, %v747
        %749 = vmatmul.bf16.gmra.mxu0 %v348
        %v750 = vpop.f32.mrf.mxu0
        %v751 = vadd.f32 %v427, %v750
        %v752 = vpop.f32.mrf.mxu0
        %v753 = vadd.f32 %v427, %v752
        %754 = vmatmul.bf16.gmra.mxu0 %v349
        %v755 = vpop.f32.mrf.mxu0
        %v756 = vadd.f32 %v427, %v755
        %v757 = vpop.f32.mrf.mxu0
        %v758 = vadd.f32 %v427, %v757
        %759 = vmatmul.bf16.gmra.mxu0 %v350
        %v760 = vpop.f32.mrf.mxu0
        %v761 = vadd.f32 %v427, %v760
        %v762 = vpop.f32.mrf.mxu0
        %v763 = vadd.f32 %v427, %v762
        %764 = vmatmul.bf16.gmra.mxu0 %v351
        %v765 = vpop.f32.mrf.mxu0
        %v766 = vadd.f32 %v427, %v765
        %v767 = vpop.f32.mrf.mxu0
        %v768 = vadd.f32 %v427, %v767
        %769 = vdwg.mxu0
        %770 = vmatpush.bf16.msra.mxu0 %v423
        %771 = vmatpush.bf16.msra.mxu0 %v420
        %772 = vmatpush.bf16.msra.mxu0 %v417
        %773 = vmatpush.bf16.msra.mxu0 %v414
        %774 = vmatpush.bf16.msra.mxu0 %v411
        %775 = vmatpush.bf16.msra.mxu0 %v408
        %776 = vmatpush.bf16.msra.mxu0 %v405
        %777 = vmatpush.bf16.msra.mxu0 %v402
        %778 = vmatmul.bf16.gmra.mxu0 %v320
        %v779 = vpop.f32.mrf.mxu0
        %v780 = vadd.f32 %v428, %v779
        %v781 = vpop.f32.mrf.mxu0
        %v782 = vadd.f32 %v428, %v781
        %783 = vmatmul.bf16.gmra.mxu0 %v321
        %v784 = vpop.f32.mrf.mxu0
        %v785 = vadd.f32 %v428, %v784
        %v786 = vpop.f32.mrf.mxu0
        %v787 = vadd.f32 %v428, %v786
        %788 = vmatmul.bf16.gmra.mxu0 %v322
        %v789 = vpop.f32.mrf.mxu0
        %v790 = vadd.f32 %v428, %v789
        %v791 = vpop.f32.mrf.mxu0
        %v792 = vadd.f32 %v428, %v791
        %793 = vmatmul.bf16.gmra.mxu0 %v323
        %v794 = vpop.f32.mrf.mxu0
        %v795 = vadd.f32 %v428, %v794
        %v796 = vpop.f32.mrf.mxu0
        %v797 = vadd.f32 %v428, %v796
        %798 = vmatmul.bf16.gmra.mxu0 %v324
        %v799 = vpop.f32.mrf.mxu0
        %v800 = vadd.f32 %v428, %v799
        %v801 = vpop.f32.mrf.mxu0
        %v802 = vadd.f32 %v428, %v801
        %803 = vmatmul.bf16.gmra.mxu0 %v325
        %v804 = vpop.f32.mrf.mxu0
        %v805 = vadd.f32 %v428, %v804
        %v806 = vpop.f32.mrf.mxu0
        %v807 = vadd.f32 %v428, %v806
        %808 = vmatmul.bf16.gmra.mxu0 %v326
        %v809 = vpop.f32.mrf.mxu0
        %v810 = vadd.f32 %v428, %v809
        %v811 = vpop.f32.mrf.mxu0
        %v812 = vadd.f32 %v428, %v811
        %813 = vmatmul.bf16.gmra.mxu0 %v327
        %v814 = vpop.f32.mrf.mxu0
        %v815 = vadd.f32 %v428, %v814
        %v816 = vpop.f32.mrf.mxu0
        %v817 = vadd.f32 %v428, %v816
        %818 = vmatmul.bf16.gmra.mxu0 %v328
        %v819 = vpop.f32.mrf.mxu0
        %v820 = vadd.f32 %v428, %v819
        %v821 = vpop.f32.mrf.mxu0
        %v822 = vadd.f32 %v428, %v821
        %823 = vmatmul.bf16.gmra.mxu0 %v329
        %v824 = vpop.f32.mrf.mxu0
        %v825 = vadd.f32 %v428, %v824
        %v826 = vpop.f32.mrf.mxu0
        %v827 = vadd.f32 %v428, %v826
        %828 = vmatmul.bf16.gmra.mxu0 %v330
        %v829 = vpop.f32.mrf.mxu0
        %v830 = vadd.f32 %v428, %v829
        %v831 = vpop.f32.mrf.mxu0
        %v832 = vadd.f32 %v428, %v831
        %833 = vmatmul.bf16.gmra.mxu0 %v331
        %v834 = vpop.f32.mrf.mxu0
        %v835 = vadd.f32 %v428, %v834
        %v836 = vpop.f32.mrf.mxu0
        %v837 = vadd.f32 %v428, %v836
        %838 = vmatmul.bf16.gmra.mxu0 %v332
        %v839 = vpop.f32.mrf.mxu0
        %v840 = vadd.f32 %v428, %v839
        %v841 = vpop.f32.mrf.mxu0
        %v842 = vadd.f32 %v428, %v841
        %843 = vmatmul.bf16.gmra.mxu0 %v333
        %v844 = vpop.f32.mrf.mxu0
        %v845 = vadd.f32 %v428, %v844
        %v846 = vpop.f32.mrf.mxu0
        %v847 = vadd.f32 %v428, %v846
        %848 = vmatmul.bf16.gmra.mxu0 %v334
        %v849 = vpop.f32.mrf.mxu0
        %v850 = vadd.f32 %v428, %v849
        %v851 = vpop.f32.mrf.mxu0
        %v852 = vadd.f32 %v428, %v851
        %853 = vmatmul.bf16.gmra.mxu0 %v335
        %v854 = vpop.f32.mrf.mxu0
        %v855 = vadd.f32 %v428, %v854
        %v856 = vpop.f32.mrf.mxu0
        %v857 = vadd.f32 %v428, %v856
        %858 = vmatmul.bf16.gmra.mxu0 %v336
        %v859 = vpop.f32.mrf.mxu0
        %v860 = vadd.f32 %v428, %v859
        %v861 = vpop.f32.mrf.mxu0
        %v862 = vadd.f32 %v428, %v861
        %863 = vmatmul.bf16.gmra.mxu0 %v337
        %v864 = vpop.f32.mrf.mxu0
        %v865 = vadd.f32 %v428, %v864
        %v866 = vpop.f32.mrf.mxu0
        %v867 = vadd.f32 %v428, %v866
        %868 = vmatmul.bf16.gmra.mxu0 %v338
        %v869 = vpop.f32.mrf.mxu0
        %v870 = vadd.f32 %v428, %v869
        %v871 = vpop.f32.mrf.mxu0
        %v872 = vadd.f32 %v428, %v871
        %873 = vmatmul.bf16.gmra.mxu0 %v339
        %v874 = vpop.f32.mrf.mxu0
        %v875 = vadd.f32 %v428, %v874
        %v876 = vpop.f32.mrf.mxu0
        %v877 = vadd.f32 %v428, %v876
        %878 = vmatmul.bf16.gmra.mxu0 %v340
        %v879 = vpop.f32.mrf.mxu0
        %v880 = vadd.f32 %v428, %v879
        %v881 = vpop.f32.mrf.mxu0
        %v882 = vadd.f32 %v428, %v881
        %883 = vmatmul.bf16.gmra.mxu0 %v341
        %v884 = vpop.f32.mrf.mxu0
        %v885 = vadd.f32 %v428, %v884
        %v886 = vpop.f32.mrf.mxu0
        %v887 = vadd.f32 %v428, %v886
        %888 = vmatmul.bf16.gmra.mxu0 %v342
        %v889 = vpop.f32.mrf.mxu0
        %v890 = vadd.f32 %v428, %v889
        %v891 = vpop.f32.mrf.mxu0
        %v892 = vadd.f32 %v428, %v891
        %893 = vmatmul.bf16.gmra.mxu0 %v343
        %v894 = vpop.f32.mrf.mxu0
        %v895 = vadd.f32 %v428, %v894
        %v896 = vpop.f32.mrf.mxu0
        %v897 = vadd.f32 %v428, %v896
        %898 = vmatmul.bf16.gmra.mxu0 %v344
        %v899 = vpop.f32.mrf.mxu0
        %v900 = vadd.f32 %v428, %v899
        %v901 = vpop.f32.mrf.mxu0
        %v902 = vadd.f32 %v428, %v901
        %903 = vmatmul.bf16.gmra.mxu0 %v345
        %v904 = vpop.f32.mrf.mxu0
        %v905 = vadd.f32 %v428, %v904
        %v906 = vpop.f32.mrf.mxu0
        %v907 = vadd.f32 %v428, %v906
        %908 = vmatmul.bf16.gmra.mxu0 %v346
        %v909 = vpop.f32.mrf.mxu0
        %v910 = vadd.f32 %v428, %v909
        %v911 = vpop.f32.mrf.mxu0
        %v912 = vadd.f32 %v428, %v911
        %913 = vmatmul.bf16.gmra.mxu0 %v347
        %v914 = vpop.f32.mrf.mxu0
        %v915 = vadd.f32 %v428, %v914
        %v916 = vpop.f32.mrf.mxu0
        %v917 = vadd.f32 %v428, %v916
        %918 = vmatmul.bf16.gmra.mxu0 %v348
        %v919 = vpop.f32.mrf.mxu0
        %v920 = vadd.f32 %v428, %v919
        %v921 = vpop.f32.mrf.mxu0
        %v922 = vadd.f32 %v428, %v921
        %923 = vmatmul.bf16.gmra.mxu0 %v349
        %v924 = vpop.f32.mrf.mxu0
        %v925 = vadd.f32 %v428, %v924
        %v926 = vpop.f32.mrf.mxu0
        %v927 = vadd.f32 %v428, %v926
        %928 = vmatmul.bf16.gmra.mxu0 %v350
        %v929 = vpop.f32.mrf.mxu0
        %v930 = vadd.f32 %v428, %v929
        %v931 = vpop.f32.mrf.mxu0
        %v932 = vadd.f32 %v428, %v931
        %933 = vmatmul.bf16.gmra.mxu0 %v351
        %v934 = vpop.f32.mrf.mxu0
        %v935 = vadd.f32 %v428, %v934
        %v936 = vpop.f32.mrf.mxu0
        %v937 = vadd.f32 %v428, %v936
        %938 = vdwg.mxu0
        %939 = vst [vmem:[%s250] sm:$0xff] %v442
        %940 = vst [vmem:[%s250 + $0x8] sm:$0xff] %v611
        %941 = vst [vmem:[%s250 + $0x10] sm:$0xff] %v780
        %942 = vst [vmem:[%s250 + $0x18] sm:$0xff] %v444
        %943 = vst [vmem:[%s250 + $0x20] sm:$0xff] %v613
        %944 = vst [vmem:[%s250 + $0x28] sm:$0xff] %v782
        %945 = vst [vmem:[%s250 + $0x30] sm:$0xff] %v447
        %946 = vst [vmem:[%s250 + $0x38] sm:$0xff] %v616
        %947 = vst [vmem:[%s250 + $0x40] sm:$0xff] %v785
        %948 = vst [vmem:[%s250 + $0x48] sm:$0xff] %v449
        %949 = vst [vmem:[%s250 + $0x50] sm:$0xff] %v618
        %950 = vst [vmem:[%s250 + $0x58] sm:$0xff] %v787
        %951 = vst [vmem:[%s250 + $0x60] sm:$0xff] %v452
        %952 = vst [vmem:[%s250 + $0x68] sm:$0xff] %v621
        %953 = vst [vmem:[%s250 + $0x70] sm:$0xff] %v790
        %954 = vst [vmem:[%s250 + $0x78] sm:$0xff] %v454
        %955 = vst [vmem:[%s250 + $0x80] sm:$0xff] %v623
        %956 = vst [vmem:[%s250 + $0x88] sm:$0xff] %v792
        %957 = vst [vmem:[%s250 + $0x90] sm:$0xff] %v457
        %958 = vst [vmem:[%s250 + $0x98] sm:$0xff] %v626
        %959 = vst [vmem:[%s250 + $0xa0] sm:$0xff] %v795
        %960 = vst [vmem:[%s250 + $0xa8] sm:$0xff] %v459
        %961 = vst [vmem:[%s250 + $0xb0] sm:$0xff] %v628
        %962 = vst [vmem:[%s250 + $0xb8] sm:$0xff] %v797
        %963 = vst [vmem:[%s250 + $0xc0] sm:$0xff] %v462
        %964 = vst [vmem:[%s250 + $0xc8] sm:$0xff] %v631
        %965 = vst [vmem:[%s250 + $0xd0] sm:$0xff] %v800
        %966 = vst [vmem:[%s250 + $0xd8] sm:$0xff] %v464
        %967 = vst [vmem:[%s250 + $0xe0] sm:$0xff] %v633
        %968 = vst [vmem:[%s250 + $0xe8] sm:$0xff] %v802
        %969 = vst [vmem:[%s250 + $0xf0] sm:$0xff] %v467
        %970 = vst [vmem:[%s250 + $0xf8] sm:$0xff] %v636
        %971 = vst [vmem:[%s250 + $0x100] sm:$0xff] %v805
        %972 = vst [vmem:[%s250 + $0x108] sm:$0xff] %v469
        %973 = vst [vmem:[%s250 + $0x110] sm:$0xff] %v638
        %974 = vst [vmem:[%s250 + $0x118] sm:$0xff] %v807
        %975 = vst [vmem:[%s250 + $0x120] sm:$0xff] %v472
        %976 = vst [vmem:[%s250 + $0x128] sm:$0xff] %v641
        %977 = vst [vmem:[%s250 + $0x130] sm:$0xff] %v810
        %978 = vst [vmem:[%s250 + $0x138] sm:$0xff] %v474
        %979 = vst [vmem:[%s250 + $0x140] sm:$0xff] %v643
        %980 = vst [vmem:[%s250 + $0x148] sm:$0xff] %v812
        %981 = vst [vmem:[%s250 + $0x150] sm:$0xff] %v477
        %982 = vst [vmem:[%s250 + $0x158] sm:$0xff] %v646
        %983 = vst [vmem:[%s250 + $0x160] sm:$0xff] %v815
        %984 = vst [vmem:[%s250 + $0x168] sm:$0xff] %v479
        %985 = vst [vmem:[%s250 + $0x170] sm:$0xff] %v648
        %986 = vst [vmem:[%s250 + $0x178] sm:$0xff] %v817
        %987 = vst [vmem:[%s250 + $0x180] sm:$0xff] %v482
        %988 = vst [vmem:[%s250 + $0x188] sm:$0xff] %v651
        %989 = vst [vmem:[%s250 + $0x190] sm:$0xff] %v820
        %990 = vst [vmem:[%s250 + $0x198] sm:$0xff] %v484
        %991 = vst [vmem:[%s250 + $0x1a0] sm:$0xff] %v653
        %992 = vst [vmem:[%s250 + $0x1a8] sm:$0xff] %v822
        %993 = vst [vmem:[%s250 + $0x1b0] sm:$0xff] %v487
        %994 = vst [vmem:[%s250 + $0x1b8] sm:$0xff] %v656
        %995 = vst [vmem:[%s250 + $0x1c0] sm:$0xff] %v825
        %996 = vst [vmem:[%s250 + $0x1c8] sm:$0xff] %v489
        %997 = vst [vmem:[%s250 + $0x1d0] sm:$0xff] %v658
        %998 = vst [vmem:[%s250 + $0x1d8] sm:$0xff] %v827
        %999 = vst [vmem:[%s250 + $0x1e0] sm:$0xff] %v492
        %1000 = vst [vmem:[%s250 + $0x1e8] sm:$0xff] %v661
        %1001 = vst [vmem:[%s250 + $0x1f0] sm:$0xff] %v830
        %1002 = vst [vmem:[%s250 + $0x1f8] sm:$0xff] %v494
        %1003 = vst [vmem:[%s250 + $0x200] sm:$0xff] %v663
        %1004 = vst [vmem:[%s250 + $0x208] sm:$0xff] %v832
        %1005 = vst [vmem:[%s250 + $0x210] sm:$0xff] %v497
        %1006 = vst [vmem:[%s250 + $0x218] sm:$0xff] %v666
        %1007 = vst [vmem:[%s250 + $0x220] sm:$0xff] %v835
        %1008 = vst [vmem:[%s250 + $0x228] sm:$0xff] %v499
        %1009 = vst [vmem:[%s250 + $0x230] sm:$0xff] %v668
        %1010 = vst [vmem:[%s250 + $0x238] sm:$0xff] %v837
        %1011 = vst [vmem:[%s250 + $0x240] sm:$0xff] %v502
        %1012 = vst [vmem:[%s250 + $0x248] sm:$0xff] %v671
        %1013 = vst [vmem:[%s250 + $0x250] sm:$0xff] %v840
        %1014 = vst [vmem:[%s250 + $0x258] sm:$0xff] %v504
        %1015 = vst [vmem:[%s250 + $0x260] sm:$0xff] %v673
        %1016 = vst [vmem:[%s250 + $0x268] sm:$0xff] %v842
        %1017 = vst [vmem:[%s250 + $0x270] sm:$0xff] %v507
        %1018 = vst [vmem:[%s250 + $0x278] sm:$0xff] %v676
        %1019 = vst [vmem:[%s250 + $0x280] sm:$0xff] %v845
        %1020 = vst [vmem:[%s250 + $0x288] sm:$0xff] %v509
        %1021 = vst [vmem:[%s250 + $0x290] sm:$0xff] %v678
        %1022 = vst [vmem:[%s250 + $0x298] sm:$0xff] %v847
        %1023 = vst [vmem:[%s250 + $0x2a0] sm:$0xff] %v512
        %1024 = vst [vmem:[%s250 + $0x2a8] sm:$0xff] %v681
        %1025 = vst [vmem:[%s250 + $0x2b0] sm:$0xff] %v850
        %1026 = vst [vmem:[%s250 + $0x2b8] sm:$0xff] %v514
        %1027 = vst [vmem:[%s250 + $0x2c0] sm:$0xff] %v683
        %1028 = vst [vmem:[%s250 + $0x2c8] sm:$0xff] %v852
        %1029 = vst [vmem:[%s250 + $0x2d0] sm:$0xff] %v517
        %1030 = vst [vmem:[%s250 + $0x2d8] sm:$0xff] %v686
        %1031 = vst [vmem:[%s250 + $0x2e0] sm:$0xff] %v855
        %1032 = vst [vmem:[%s250 + $0x2e8] sm:$0xff] %v519
        %1033 = vst [vmem:[%s250 + $0x2f0] sm:$0xff] %v688
        %1034 = vst [vmem:[%s250 + $0x2f8] sm:$0xff] %v857
        %1035 = vst [vmem:[%s250 + $0x300] sm:$0xff] %v522
        %1036 = vst [vmem:[%s250 + $0x308] sm:$0xff] %v691
        %1037 = vst [vmem:[%s250 + $0x310] sm:$0xff] %v860
        %1038 = vst [vmem:[%s250 + $0x318] sm:$0xff] %v524
        %1039 = vst [vmem:[%s250 + $0x320] sm:$0xff] %v693
        %1040 = vst [vmem:[%s250 + $0x328] sm:$0xff] %v862
        %1041 = vst [vmem:[%s250 + $0x330] sm:$0xff] %v527
        %1042 = vst [vmem:[%s250 + $0x338] sm:$0xff] %v696
        %1043 = vst [vmem:[%s250 + $0x340] sm:$0xff] %v865
        %1044 = vst [vmem:[%s250 + $0x348] sm:$0xff] %v529
        %1045 = vst [vmem:[%s250 + $0x350] sm:$0xff] %v698
        %1046 = vst [vmem:[%s250 + $0x358] sm:$0xff] %v867
        %1047 = vst [vmem:[%s250 + $0x360] sm:$0xff] %v532
        %1048 = vst [vmem:[%s250 + $0x368] sm:$0xff] %v701
        %1049 = vst [vmem:[%s250 + $0x370] sm:$0xff] %v870
        %1050 = vst [vmem:[%s250 + $0x378] sm:$0xff] %v534
        %1051 = vst [vmem:[%s250 + $0x380] sm:$0xff] %v703
        %1052 = vst [vmem:[%s250 + $0x388] sm:$0xff] %v872
        %1053 = vst [vmem:[%s250 + $0x390] sm:$0xff] %v537
        %1054 = vst [vmem:[%s250 + $0x398] sm:$0xff] %v706
        %1055 = vst [vmem:[%s250 + $0x3a0] sm:$0xff] %v875
        %1056 = vst [vmem:[%s250 + $0x3a8] sm:$0xff] %v539
        %1057 = vst [vmem:[%s250 + $0x3b0] sm:$0xff] %v708
        %1058 = vst [vmem:[%s250 + $0x3b8] sm:$0xff] %v877
        %1059 = vst [vmem:[%s250 + $0x3c0] sm:$0xff] %v542
        %1060 = vst [vmem:[%s250 + $0x3c8] sm:$0xff] %v711
        %1061 = vst [vmem:[%s250 + $0x3d0] sm:$0xff] %v880
        %1062 = vst [vmem:[%s250 + $0x3d8] sm:$0xff] %v544
        %1063 = vst [vmem:[%s250 + $0x3e0] sm:$0xff] %v713
        %1064 = vst [vmem:[%s250 + $0x3e8] sm:$0xff] %v882
        %1065 = vst [vmem:[%s250 + $0x3f0] sm:$0xff] %v547
        %1066 = vst [vmem:[%s250 + $0x3f8] sm:$0xff] %v716
        %1067 = vst [vmem:[%s250 + $0x400] sm:$0xff] %v885
        %1068 = vst [vmem:[%s250 + $0x408] sm:$0xff] %v549
        %1069 = vst [vmem:[%s250 + $0x410] sm:$0xff] %v718
        %1070 = vst [vmem:[%s250 + $0x418] sm:$0xff] %v887
        %1071 = vst [vmem:[%s250 + $0x420] sm:$0xff] %v552
        %1072 = vst [vmem:[%s250 + $0x428] sm:$0xff] %v721
        %1073 = vst [vmem:[%s250 + $0x430] sm:$0xff] %v890
        %1074 = vst [vmem:[%s250 + $0x438] sm:$0xff] %v554
        %1075 = vst [vmem:[%s250 + $0x440] sm:$0xff] %v723
        %1076 = vst [vmem:[%s250 + $0x448] sm:$0xff] %v892
        %1077 = vst [vmem:[%s250 + $0x450] sm:$0xff] %v557
        %1078 = vst [vmem:[%s250 + $0x458] sm:$0xff] %v726
        %1079 = vst [vmem:[%s250 + $0x460] sm:$0xff] %v895
        %1080 = vst [vmem:[%s250 + $0x468] sm:$0xff] %v559
        %1081 = vst [vmem:[%s250 + $0x470] sm:$0xff] %v728
        %1082 = vst [vmem:[%s250 + $0x478] sm:$0xff] %v897
        %1083 = vst [vmem:[%s250 + $0x480] sm:$0xff] %v562
        %1084 = vst [vmem:[%s250 + $0x488] sm:$0xff] %v731
        %1085 = vst [vmem:[%s250 + $0x490] sm:$0xff] %v900
        %1086 = vst [vmem:[%s250 + $0x498] sm:$0xff] %v564
        %1087 = vst [vmem:[%s250 + $0x4a0] sm:$0xff] %v733
        %1088 = vst [vmem:[%s250 + $0x4a8] sm:$0xff] %v902
        %1089 = vst [vmem:[%s250 + $0x4b0] sm:$0xff] %v567
        %1090 = vst [vmem:[%s250 + $0x4b8] sm:$0xff] %v736
        %1091 = vst [vmem:[%s250 + $0x4c0] sm:$0xff] %v905
        %1092 = vst [vmem:[%s250 + $0x4c8] sm:$0xff] %v569
        %1093 = vst [vmem:[%s250 + $0x4d0] sm:$0xff] %v738
        %1094 = vst [vmem:[%s250 + $0x4d8] sm:$0xff] %v907
        %1095 = vst [vmem:[%s250 + $0x4e0] sm:$0xff] %v572
        %1096 = vst [vmem:[%s250 + $0x4e8] sm:$0xff] %v741
        %1097 = vst [vmem:[%s250 + $0x4f0] sm:$0xff] %v910
        %1098 = vst [vmem:[%s250 + $0x4f8] sm:$0xff] %v574
        %1099 = vst [vmem:[%s250 + $0x500] sm:$0xff] %v743
        %1100 = vst [vmem:[%s250 + $0x508] sm:$0xff] %v912
        %1101 = vst [vmem:[%s250 + $0x510] sm:$0xff] %v577
        %1102 = vst [vmem:[%s250 + $0x518] sm:$0xff] %v746
        %1103 = vst [vmem:[%s250 + $0x520] sm:$0xff] %v915
        %1104 = vst [vmem:[%s250 + $0x528] sm:$0xff] %v579
        %1105 = vst [vmem:[%s250 + $0x530] sm:$0xff] %v748
        %1106 = vst [vmem:[%s250 + $0x538] sm:$0xff] %v917
        %1107 = vst [vmem:[%s250 + $0x540] sm:$0xff] %v582
        %1108 = vst [vmem:[%s250 + $0x548] sm:$0xff] %v751
        %1109 = vst [vmem:[%s250 + $0x550] sm:$0xff] %v920
        %1110 = vst [vmem:[%s250 + $0x558] sm:$0xff] %v584
        %1111 = vst [vmem:[%s250 + $0x560] sm:$0xff] %v753
        %1112 = vst [vmem:[%s250 + $0x568] sm:$0xff] %v922
        %1113 = vst [vmem:[%s250 + $0x570] sm:$0xff] %v587
        %1114 = vst [vmem:[%s250 + $0x578] sm:$0xff] %v756
        %1115 = vst [vmem:[%s250 + $0x580] sm:$0xff] %v925
        %1116 = vst [vmem:[%s250 + $0x588] sm:$0xff] %v589
        %1117 = vst [vmem:[%s250 + $0x590] sm:$0xff] %v758
        %1118 = vst [vmem:[%s250 + $0x598] sm:$0xff] %v927
        %1119 = vst [vmem:[%s250 + $0x5a0] sm:$0xff] %v592
        %1120 = vst [vmem:[%s250 + $0x5a8] sm:$0xff] %v761
        %1121 = vst [vmem:[%s250 + $0x5b0] sm:$0xff] %v930
        %1122 = vst [vmem:[%s250 + $0x5b8] sm:$0xff] %v594
        %1123 = vst [vmem:[%s250 + $0x5c0] sm:$0xff] %v763
        %1124 = vst [vmem:[%s250 + $0x5c8] sm:$0xff] %v932
        %1125 = vst [vmem:[%s250 + $0x5d0] sm:$0xff] %v597
        %1126 = vst [vmem:[%s250 + $0x5d8] sm:$0xff] %v766
        %1127 = vst [vmem:[%s250 + $0x5e0] sm:$0xff] %v935
        %1128 = vst [vmem:[%s250 + $0x5e8] sm:$0xff] %v599
        %1129 = vst [vmem:[%s250 + $0x5f0] sm:$0xff] %v768
        %1130 = vst [vmem:[%s250 + $0x5f8] sm:$0xff] %v937
        %s1131 = sand.u32 %s121, 1
        %s1132 = scalar_lea.sflag [#allocation4], %s1131
        %s1133 = sand.u32 %s121, 1
        %s1134 = smul.addr %s1133, 1536
        %s1135 = scalar_lea.vmem [#allocation8], %s1134
        // Predicated region
        $region45: #{tpu_custom_call.1} parent=31 // pred_check
          %p1136 = pneg %p131
        $region46: #{tpu_custom_call.1} parent=31 // pred_check_branch
          %1138 = sbr.rel (%p1136) target = $region48
        $region47: #{tpu_custom_call.1} parent=31 // pred_region
          %s1139 = smul.u32 64, %s25
          %s1140 = smul.u32 3, %s26
          %1142 = vsyncadd %s1132, 0
          %s1143 = smul.addr %s1139, 3
          %s1144 = sadd.s32 %s1140, %s1143
          %s1145 = smul.addr %s1144, 8
          %s1146 = scalar_lea.hbm %s3, %s1145
          %s1147 = sshll.u32 %s1135, 4
          %s1148 = int_to_ptr.vmem [resolvable:$true] %s1147
          %s1149 = sshll.u32 %s1146, 4
          %s1150 = int_to_ptr.hbm [resolvable:$true] %s1149
          %1155 = dma.vmem_to_hbm [thread:$0]  %s1148, 24576, %s1150, %s1132, 384, 384, 24
        $region48: #{tpu_custom_call.1} parent=31 // pred_fallthru
          _
      $region32: #{tpu_custom_call.1} parent=5 // pred_fallthru
        _
      %p1156 = scmp.le.s32.totalorder 2, %s16
      // Predicated region
      $region49: #{tpu_custom_call.1} parent=5 // pred_check
        %p1157 = pneg %p1156
      $region50: #{tpu_custom_call.1} parent=5 // pred_check_branch
        %1159 = sbr.rel (%p1157) target = $region52
      $region51: #{tpu_custom_call.1} parent=5 // pred_region
        %s1160 = ssub.s32 %s16, 2
        // Predicated region
        $region53: #{tpu_custom_call.1} parent=51 // pred_check
          %p1161 = pneg %p137
        $region54: #{tpu_custom_call.1} parent=51 // pred_check_branch
          %1163 = sbr.rel (%p1161) target = $region56
        $region55: #{tpu_custom_call.1} parent=51 // pred_region
          %s1164 = sand.u32 %s122, 1
          %s1165 = scalar_lea.sflag [#allocation4], %s1164
          %s1166 = sand.u32 %s122, 1
          %s1167 = smul.addr %s1166, 1536
          %s1168 = scalar_lea.vmem [#allocation8], %s1167
          %1170 = dma.done %s1165, 24576
        $region56: #{tpu_custom_call.1} parent=51 // pred_fallthru
          _
      $region52: #{tpu_custom_call.1} parent=5 // pred_fallthru
        _
    $region6: #{tpu_custom_call.1} parent=1 // loop_footer
      %s20 = sadd.s32 1, %s16
    $region7: #{tpu_custom_call.1} parent=1 // loop_footer_branch
      %15 = sbr.rel target = $region3
    $region8: #{tpu_custom_call.1} parent=1 // loop_exit
      _
    %1171 = vsyncpa [#allocation3], 1
    %s1172 = scalar_lea.sflag [#allocation3], 1
    %1173 = vsyncpa %s1172, 1
    %1174 = vsyncpa [#allocation6], 1
    %1175 = vsyncpa [#allocation4], 1
    %s1176 = scalar_lea.sflag [#allocation4], 1
    %1177 = vsyncpa %s1176, 1

</llo_original>
